<compile_context>
chip_gen: v7x
topology: tpu7x:2x2x1
jax: 0.10.0
libtpu: 0.0.40
codegen_flags: <defaults>
</compile_context>

<pallas_src>
import math
import functools

import jax
import jax.numpy as jnp
from jax.experimental import pallas as pl
from jax.experimental.pallas import tpu as pltpu


def make_pe_buffer(max_len: int, dim_embed: int, dtype=jnp.float32):
    """Mirrors PositionalEncoding.__init__; the forward's /10 is folded in."""
    assert dim_embed % 2 == 0
    position = jnp.arange(max_len, dtype=jnp.float32)[:, None]          # (L, 1)
    dim_pair = jnp.arange(0, dim_embed, 2, dtype=jnp.float32)           # (D/2,)
    div_term = jnp.exp(dim_pair * (-math.log(10000.0) / dim_embed))     # (D/2,)
    angles = position * div_term                                        # (L, D/2)
    pe = jnp.zeros((max_len, dim_embed), dtype=jnp.float32)
    pe = pe.at[:, 0::2].set(jnp.sin(angles))
    pe = pe.at[:, 1::2].set(jnp.cos(angles))
    pe = pe / 10.0                       # fold forward's "pe / 10" once here
    return pe.astype(dtype)              # (L, D), already scaled, right dtype


def _posenc_kernel(seed_ref, x_ref, pe_ref, o_ref, *, drop_prob, training):
    # x_ref / o_ref: (TR, C) tiles (batch dim squeezed); pe_ref: (TR, C).
    y = x_ref[...] + pe_ref[...]

    if training and drop_prob > 0.0:
        tr, c = y.shape
        # Deterministic per-(seed, tile, element) hash -> dropout mask.
        # Plain int32 VPU ops only; pltpu.prng_* has no interpret-mode lowering.
        # TODO(synk): on real TPU, pltpu.prng_random_bits would shave a few VPU
        # ops per element; kept portable here.
        tile_id = pl.program_id(0) * pl.num_programs(1) + pl.program_id(1)
        tile_seed = seed_ref[0] * jnp.int32(1000003) + tile_id  # no collisions
        rows = jax.lax.broadcasted_iota(jnp.int32, (tr, c), 0)
        cols = jax.lax.broadcasted_iota(jnp.int32, (tr, c), 1)
        h = (rows * jnp.int32(c) + cols) ^ (tile_seed * jnp.int32(-1640531535))
        # murmur3-style finalizer (int32 wrap-around intended; '>>' is
        # arithmetic, which keeps each step bijective and mixes well enough).
        h = h ^ (h >> 16)
        h = h * jnp.int32(-2048144789)     # 0x85EBCA6B
        h = h ^ (h >> 13)
        h = h * jnp.int32(-1028477387)     # 0xC2B2AE35
        h = h ^ (h >> 16)
        pos = jnp.bitwise_and(h, jnp.int32(0x7FFFFFFF))   # uniform in [0, 2^31)
        threshold = jnp.int32(min(int(drop_prob * (1 << 31)), (1 << 31) - 1))
        keep = pos >= threshold                            # drop with prob p
        keep_scale = jnp.asarray(1.0 / (1.0 - drop_prob), dtype=y.dtype)
        y = jnp.where(keep, y * keep_scale, jnp.asarray(0.0, dtype=y.dtype))

    o_ref[...] = y.astype(o_ref.dtype)


def _choose_layout(L, D):
    """Pick a lane-dense (R, C) view of the per-batch (L, D) slab.

    Returns (R, C, lane_pad).  lane_pad > 0 means D is padded up to C = a
    multiple of 128 in the wrapper (unmasked stores instead of vst.msk).
    """
    N = L * D
    if D % 128 == 0:
        return L, D, 0                   # already lane-dense
    if N % 128 == 0:
        C = 128
        while C * 2 <= min(N, 2048) and N % (C * 2) == 0:
            C *= 2
        return N // C, C, 0
    # D not 128-alignable: pad lanes up to the next multiple of 128.
    C = ((D + 127) // 128) * 128
    return L, C, C - D


def _pick_row_tile(R, C, itemsize, target_bytes=4 << 20):
    """Largest row tile whose (TR, C) block stays under target_bytes.

    Prefers a divisor of R that is a multiple of 8; otherwise returns a capped
    multiple-of-8 tile and the wrapper uses a pl.cdiv grid (ragged last tile),
    so the block never exceeds the cap (fits v7x's 64 MiB VMEM)."""
    if R * C * itemsize <= target_bytes:
        return R                          # full extent == array dim (always legal)
    cap = max(8, (target_bytes // (C * itemsize)) // 8 * 8)
    t = min(cap, (R // 8) * 8)
    while t >= 8:
        if R % t == 0:
            return t
        t -= 8
    return cap                            # ragged last tile via cdiv grid


def positional_encoding(x, pe, *, drop_prob: float = 0.1,
                        training: bool = False, seed: int = 0):
    """x: (B, L, D); pe: (L, D) already scaled by 1/10 (see make_pe_buffer).

    Note: dropout mask is deterministic in (seed, tile); callers must stride
    `seed` per training step to get fresh masks."""
    B, L, D = x.shape
    assert pe.shape == (L, D), "forward adds pe[:, :max_len]; needs seq_len == max_len"
    if pe.dtype != x.dtype:               # normally a no-op: build pe in x.dtype
        pe = pe.astype(x.dtype)

    R, C, lane_pad = _choose_layout(L, D)
    if lane_pad:
        x = jnp.pad(x, ((0, 0), (0, 0), (0, lane_pad)))
        pe = jnp.pad(pe, ((0, 0), (0, lane_pad)))

    itemsize = jnp.dtype(x.dtype).itemsize
    TR = _pick_row_tile(R, C, itemsize)
    grid_r = pl.cdiv(R, TR)

    x2 = x.reshape(B, R, C)
    pe2 = pe.reshape(R, C)

    kernel = functools.partial(_posenc_kernel,
                               drop_prob=float(drop_prob), training=bool(training))
    seed_arr = jnp.array([seed], dtype=jnp.int32)

    out2 = pl.pallas_call(
        kernel,
        out_shape=jax.ShapeDtypeStruct((B, R, C), x.dtype),
        grid_spec=pltpu.PrefetchScalarGridSpec(
            num_scalar_prefetch=1,                     # seed lives in SMEM
            # r outer, b inner: pe's block index is unchanged across the inner
            # batch loop, so Pallas does not re-DMA it per batch element.
            grid=(grid_r, B),
            in_specs=[
                pl.BlockSpec((None, TR, C), lambda r, b, seed: (b, r, 0)),  # x
                pl.BlockSpec((TR, C), lambda r, b, seed: (r, 0)),           # pe
            ],
            out_specs=pl.BlockSpec((None, TR, C), lambda r, b, seed: (b, r, 0)),
        ),
        compiler_params=pltpu.CompilerParams(
            dimension_semantics=("parallel", "parallel"),
            vmem_limit_bytes=32 << 20),    # 3 arrays x 2 bufs x <=4 MiB = 24 MiB
    )(seed_arr, x2, pe2)

    if lane_pad:
        return out2.reshape(B, L, C)[:, :, :D]
    return out2.reshape(B, L, D)


if __name__ == "__main__":
    # Small shapes consistent with the module: dim_embed=32, max_len=8, batch=2.
    batch, max_len, dim_embed = 2, 8, 32
    drop_prob = 0.1

    key = jax.random.PRNGKey(0)
    x = jax.random.normal(key, (batch, max_len, dim_embed), dtype=jnp.float32)

    pe = make_pe_buffer(max_len, dim_embed, dtype=x.dtype)   # already /10, x.dtype

    # Eval-mode forward (dropout is identity).
    out = positional_encoding(x, pe, drop_prob=drop_prob, training=False)
    out = jax.block_until_ready(out)

    ref = x + pe[None, :, :]
    assert out.shape == x.shape and out.dtype == x.dtype
    assert jnp.allclose(out, ref, atol=1e-6, rtol=1e-6), "eval-mode mismatch vs reference"

    # Training-mode smoke test: kept values must equal the deterministic result
    # scaled by 1/(1-p), dropped values must be 0.
    out_tr = positional_encoding(x, pe, drop_prob=drop_prob,
                                 training=True, seed=123)
    out_tr = jax.block_until_ready(out_tr)
    kept = out_tr != 0   # TODO(synk): fragile if x+pe is exactly 0 for a kept elem
    assert out_tr.shape == x.shape
    assert jnp.allclose(jnp.where(kept, out_tr, 0.0),
                        jnp.where(kept, ref / (1.0 - drop_prob), 0.0),
                        atol=1e-5, rtol=1e-5), "dropout kept values mismatch"

    print("KERNEL_OK")
</pallas_src>

<mosaic_0001>
module attributes {stable_mosaic.version = 11 : i64} {
  func.func @_posenc_kernel(%arg0: i32, %arg1: i32, %arg2: memref<1xi32, #tpu.memory_space<smem>>, %arg3: memref<1x1x256xf32, #tpu.memory_space<vmem>>, %arg4: memref<1x256xf32, #tpu.memory_space<vmem>>, %arg5: memref<1x1x256xf32, #tpu.memory_space<vmem>>) attributes {dimension_semantics = [#tpu.dimension_semantics<parallel>, #tpu.dimension_semantics<parallel>], iteration_bounds = array<i64: 1, 2>, scalar_prefetch = 1 : i64, scratch_operands = 0 : i64, tpu.core_type = #tpu.core_type<tc>, window_params = [{transform_indices = @transform_0, window_bounds = array<i64: 1, 1, 256>}, {transform_indices = @transform_1, window_bounds = array<i64: 1, 256>}, {transform_indices = @transform_2, window_bounds = array<i64: 1, 1, 256>}]} {
    %c0 = arith.constant 0 : index
    %c0_0 = arith.constant 0 : index
    %c0_1 = arith.constant 0 : index
    %0 = vector.load %arg3[%c0, %c0_0, %c0_1] : memref<1x1x256xf32, #tpu.memory_space<vmem>>, vector<1x1x256xf32>
    %1 = vector.shape_cast %0 : vector<1x1x256xf32> to vector<1x256xf32>
    %c0_2 = arith.constant 0 : index
    %c0_3 = arith.constant 0 : index
    %2 = vector.load %arg4[%c0_2, %c0_3] : memref<1x256xf32, #tpu.memory_space<vmem>>, vector<1x256xf32>
    %3 = arith.addf %1, %2 : vector<1x256xf32>
    %c0_4 = arith.constant 0 : index
    %c0_5 = arith.constant 0 : index
    %c0_6 = arith.constant 0 : index
    %4 = vector.load %arg5[%c0_4, %c0_5, %c0_6] : memref<1x1x256xf32, #tpu.memory_space<vmem>>, vector<1x1x256xf32>
    %5 = vector.shape_cast %4 : vector<1x1x256xf32> to vector<1x256xf32>
    %6 = vector.shape_cast %3 : vector<1x256xf32> to vector<1x1x256xf32>
    tpu.vector_store %arg5[%c0_4, %c0_5, %c0_6], %6 {strides = array<i32>} : memref<1x1x256xf32, #tpu.memory_space<vmem>>, vector<1x1x256xf32>,
    return
  }
  func.func @transform_0(%arg0: i32, %arg1: i32, %arg2: memref<1xi32, #tpu.memory_space<smem>>) -> (i32, i32, i32) {
    %c0_i32 = arith.constant 0 : i32
    %c0_i32_0 = arith.constant 0 : i32
    return %arg1, %arg0, %c0_i32 : i32, i32, i32
  }
  func.func @transform_1(%arg0: i32, %arg1: i32, %arg2: memref<1xi32, #tpu.memory_space<smem>>) -> (i32, i32) {
    %c0_i32 = arith.constant 0 : i32
    %c0_i32_0 = arith.constant 0 : i32
    return %arg0, %c0_i32 : i32, i32
  }
  func.func @transform_2(%arg0: i32, %arg1: i32, %arg2: memref<1xi32, #tpu.memory_space<smem>>) -> (i32, i32, i32) {
    %c0_i32 = arith.constant 0 : i32
    %c0_i32_0 = arith.constant 0 : i32
    return %arg1, %arg0, %c0_i32 : i32, i32, i32
  }
}

</mosaic_0001>

<llo_original>
// kernel: tpu_custom_call.1
$region0: #{tpu_custom_call.1}
  #allocation0 [shape = 'u32[]', space=smem, size = 0x4, offset = 0x4, fixed_abs, tag = 'smem constant byte address 0x4 - core index']
  #allocation1 [shape = 'u32[144,128]{1,0:T(1,128)}', space=vmem, size = 0x12000, scoped, tag = 'internal scratch']
  #allocation2 [shape = 's32[1]{0}', space=sflag, size = 0x4, scoped, tag = 'scoped memory for tpu_custom_call.1']
  #allocation3 [shape = 's32[1]{0:T(128)S(6)}', space=smem, size = 0x200, scoped, tag = 'prefetched SMEM operand 0']
  %s0 = inlined_call_operand.<no memory space> [shape: s32[1], index: 0, kind: input, shape index: {}]
  %s1 = inlined_call_operand.hbm [shape: f32[2,1,256], index: 1, kind: input, shape index: {}]
  %s2 = inlined_call_operand.vmem [shape: f32[1,256], index: 2, kind: input, shape index: {}]
  %s3 = inlined_call_operand.hbm [shape: f32[2,1,256], index: 3, kind: output, shape index: {}]
  %s4 = sld [smem:[#allocation0]]
  $region45: #{tpu_custom_call.1} parent=0
    _
  %s6 = ssub.s32 1, %s4
  %s7 = scalar_select 0, %s6, %s4
  %8 = sst [smem:[#allocation3]] %s0
  $region1: #{tpu_custom_call.1} parent=0
    #allocation4 [shape = 'u8[2048]{0}', space=vmem, size = 0x800, scoped, tag = 'input window, operand 1']
    #allocation5 [shape = 's32[2]{0}', space=sflag, size = 0x8, scoped, tag = 'scoped memory for tpu_custom_call.1']
    #allocation6 [shape = 's32[2]{0}', space=sflag, size = 0x8, scoped, tag = 'scoped memory for tpu_custom_call.1']
    #allocation7 [shape = 'u8[2048]{0}', space=vmem, size = 0x800, scoped, tag = 'output window, operand 0']
    %9 = vsyncpa [#allocation5], 0
    %s10 = scalar_lea.sflag [#allocation5], 1
    %11 = vsyncpa %s10, 0
    %12 = vsyncpa [#allocation6], 0
    %s13 = scalar_lea.sflag [#allocation6], 1
    %14 = vsyncpa %s13, 0
    loop: start=0, step=1, limit=4
    $region2: #{tpu_custom_call.1} parent=1 // loop_pre_header
      _
    $region3: #{tpu_custom_call.1} parent=1 // loop_header
      %s16 = sphi 0, %s20
      %p17 = scmp.ge.s32.totalorder %s16, 4
      %s23 = sphi 0, %s35
      %s24 = sphi 0, %s31
      %s25 = sphi 0, %s23
      %s26 = sphi 0, %s24
      %s27 = sphi 0, %s25
      %s28 = sphi 0, %s26
      %s40 = sphi 0, %s42
      %s43 = sphi 0, %s40
      %s44 = sphi 0, %s43
      %s60 = sphi 0, %s44
      %s66 = sphi 0, %s68
      %s69 = sphi 0, %s66
      %s70 = sphi 0, %s69
      %s86 = sphi 0, %s70
      %s94 = sphi 0, %s96
      %s97 = sphi 0, %s94
      %s98 = sphi 0, %s97
      %s114 = sphi 0, %s98
    $region4: #{tpu_custom_call.1} parent=1 // loop_header_branch
      %19 = sbr.rel (%p17) target = $region8
    $region5: #{tpu_custom_call.1} parent=1 // loop_body
      %s21 = ssub.s32 %s16, 1
      %s22 = ssub.s32 %s16, 2
      %s29 = sadd.s32 1, %s24
      %p30 = scmp.ge.s32.totalorder %s29, 2
      %s31 = scalar_select %p30, 0, %s29
      %s32 = sadd.s32 1, %s23
      %s33 = scalar_select %p30, %s32, %s23
      %p34 = scmp.ge.s32.totalorder %s33, 1
      %s35 = scalar_select %p34, 0, %s33
      %s36 = ssub.s32 %s24, %s31
      %s37 = ssub.s32 %s23, %s35
      %s38 = sor.u32 %s36, %s37
      %p39 = scmp.eq.s32.totalorder %s38, 0
      %s41 = sadd.s32 %s40, 1
      %s42 = scalar_select %p39, %s40, %s41
      %p45 = pneg %p39
      %p46 = scmp.eq.s32.totalorder %s16, 1
      %p47 = por %p45, %p46
      %p48 = scmp.ne.s32.totalorder %s40, %s43
      %p49 = scmp.eq.s32.totalorder %s16, 0
      %p50 = por %p48, %p49
      %p51 = scmp.ne.s32.totalorder %s40, %s43
      %p52 = scmp.eq.s32.totalorder %s21, 1
      %p53 = por %p51, %p52
      %p54 = scmp.ne.s32.totalorder %s43, %s44
      %p55 = scmp.eq.s32.totalorder %s21, 0
      %p56 = por %p54, %p55
      %p57 = scmp.ne.s32.totalorder %s43, %s44
      %p58 = scmp.eq.s32.totalorder %s22, 1
      %p59 = por %p57, %p58
      %p61 = scmp.ne.s32.totalorder %s44, %s60
      %p62 = scmp.eq.s32.totalorder %s22, 0
      %p63 = por %p61, %p62
      %s64 = ssub.s32 %s23, %s35
      %p65 = scmp.eq.s32.totalorder %s64, 0
      %s67 = sadd.s32 %s66, 1
      %s68 = scalar_select %p65, %s66, %s67
      %p71 = pneg %p65
      %p72 = scmp.eq.s32.totalorder %s16, 1
      %p73 = por %p71, %p72
      %p74 = scmp.ne.s32.totalorder %s66, %s69
      %p75 = scmp.eq.s32.totalorder %s16, 0
      %p76 = por %p74, %p75
      %p77 = scmp.ne.s32.totalorder %s66, %s69
      %p78 = scmp.eq.s32.totalorder %s21, 1
      %p79 = por %p77, %p78
      %p80 = scmp.ne.s32.totalorder %s69, %s70
      %p81 = scmp.eq.s32.totalorder %s21, 0
      %p82 = por %p80, %p81
      %p83 = scmp.ne.s32.totalorder %s69, %s70
      %p84 = scmp.eq.s32.totalorder %s22, 1
      %p85 = por %p83, %p84
      %p87 = scmp.ne.s32.totalorder %s70, %s86
      %p88 = scmp.eq.s32.totalorder %s22, 0
      %p89 = por %p87, %p88
      %s90 = ssub.s32 %s24, %s31
      %s91 = ssub.s32 %s23, %s35
      %s92 = sor.u32 %s90, %s91
      %p93 = scmp.eq.s32.totalorder %s92, 0
      %s95 = sadd.s32 %s94, 1
      %s96 = scalar_select %p93, %s94, %s95
      %p99 = pneg %p93
      %p100 = scmp.eq.s32.totalorder %s16, 1
      %p101 = por %p99, %p100
      %p102 = scmp.ne.s32.totalorder %s94, %s97
      %p103 = scmp.eq.s32.totalorder %s16, 0
      %p104 = por %p102, %p103
      %p105 = scmp.ne.s32.totalorder %s94, %s97
      %p106 = scmp.eq.s32.totalorder %s21, 1
      %p107 = por %p105, %p106
      %p108 = scmp.ne.s32.totalorder %s97, %s98
      %p109 = scmp.eq.s32.totalorder %s21, 0
      %p110 = por %p108, %p109
      %p111 = scmp.ne.s32.totalorder %s97, %s98
      %p112 = scmp.eq.s32.totalorder %s22, 1
      %p113 = por %p111, %p112
      %p115 = scmp.ne.s32.totalorder %s98, %s114
      %p116 = scmp.eq.s32.totalorder %s22, 0
      %p117 = por %p115, %p116
      %p118 = scmp.le.s32.totalorder 1, %s16
      %p119 = scmp.lt.s32.totalorder %s16, 3
      %p120 = pnand %p118, %p119
      %p121 = pneg %p120
      // Predicated region
      $region9: #{tpu_custom_call.1} parent=5 // pred_check
        _
      $region10: #{tpu_custom_call.1} parent=5 // pred_check_branch
        %123 = sbr.rel (%p120) target = $region12
      $region11: #{tpu_custom_call.1} parent=5 // pred_region
        %s124 = ssub.s32 %s16, 1
        // Predicated region
        $region13: #{tpu_custom_call.1} parent=11 // pred_check
          %p125 = pneg %p82
        $region14: #{tpu_custom_call.1} parent=11 // pred_check_branch
          %127 = sbr.rel (%p125) target = $region16
        $region15: #{tpu_custom_call.1} parent=11 // pred_region
          %p128 = scmp.lt.s32.totalorder %s25, 0
          %s129 = scalar_select %p128, %s25, 0
          %s130 = smul.addr %s129, 2
          %s131 = scalar_lea.vmem %s2, %s130
        $region16: #{tpu_custom_call.1} parent=11 // pred_fallthru
          _
      $region12: #{tpu_custom_call.1} parent=5 // pred_fallthru
        _
      %p132 = scmp.lt.s32.totalorder %s16, 2
      // Predicated region
      $region17: #{tpu_custom_call.1} parent=5 // pred_check
        %p133 = pneg %p132
      $region18: #{tpu_custom_call.1} parent=5 // pred_check_branch
        %135 = sbr.rel (%p133) target = $region20
      $region19: #{tpu_custom_call.1} parent=5 // pred_region
        // Predicated region
        $region21: #{tpu_custom_call.1} parent=19 // pred_check
          %p136 = pneg %p50
        $region22: #{tpu_custom_call.1} parent=19 // pred_check_branch
          %138 = sbr.rel (%p136) target = $region24
        $region23: #{tpu_custom_call.1} parent=19 // pred_region
          %s139 = sand.u32 %s40, 1
          %s140 = scalar_lea.sflag [#allocation5], %s139
          %s141 = sand.u32 %s40, 1
          %s142 = smul.addr %s141, 2
          %s143 = scalar_lea.vmem [#allocation4], %s142
          %s145 = ssub.s32 32, 32
          %146 = vsyncadd %s140, %s145
          %s147 = smul.addr %s23, 2
          %s148 = smul.addr %s24, 2
          %s149 = sadd.s32 %s147, %s148
          %s150 = smul.addr %s149, 16
          %s151 = scalar_lea.hbm %s1, %s150
          %s153 = sshll.u32 %s143, 4
          %s154 = int_to_ptr.vmem [resolvable:$true] %s153
          %156 = dma.hbm_to_vmem [thread:$0]  %s151, 32, %s154, %s140
        $region24: #{tpu_custom_call.1} parent=19 // pred_fallthru
          _
      $region20: #{tpu_custom_call.1} parent=5 // pred_fallthru
        _
      %p157 = scmp.le.s32.totalorder 1, %s16
      %p158 = scmp.lt.s32.totalorder %s16, 3
      %p159 = pnand %p157, %p158
      %p160 = pneg %p159
      // Predicated region
      $region25: #{tpu_custom_call.1} parent=5 // pred_check
        _
      $region26: #{tpu_custom_call.1} parent=5 // pred_check_branch
        %162 = sbr.rel (%p159) target = $region28
      $region27: #{tpu_custom_call.1} parent=5 // pred_region
        %s163 = ssub.s32 %s16, 1
        %s164 = sand.u32 %s43, 1
        %s165 = scalar_lea.sflag [#allocation5], %s164
        %s166 = sand.u32 %s43, 1
        %s167 = smul.addr %s166, 2
        %s168 = scalar_lea.vmem [#allocation4], %s167
        // Predicated region
        $region29: #{tpu_custom_call.1} parent=27 // pred_check
          %p169 = pneg %p56
        $region30: #{tpu_custom_call.1} parent=27 // pred_check_branch
          %171 = sbr.rel (%p169) target = $region32
        $region31: #{tpu_custom_call.1} parent=27 // pred_region
          %172 = dma.done %s165, 32
        $region32: #{tpu_custom_call.1} parent=27 // pred_fallthru
          _
        %s173 = sand.u32 %s43, 1
        %s174 = scalar_lea.sflag [#allocation5], %s173
        %s175 = sand.u32 %s43, 1
        %s176 = smul.addr %s175, 2
        %s177 = scalar_lea.vmem [#allocation4], %s176
        %p178 = pneg %p56
        %p179 = pneg %p53
        %p180 = scmp.lt.s32.totalorder %s25, 0
        %s181 = scalar_select %p180, %s25, 0
        %s182 = smul.addr %s181, 2
        %s183 = scalar_lea.vmem %s2, %s182
        %p184 = pneg %p82
        %p185 = pneg %p79
        %p186 = pneg %p110
        %p187 = pneg %p107
        %s188 = sand.u32 %s97, 1
        %s189 = scalar_lea.sflag [#allocation6], %s188
        %s190 = sand.u32 %s97, 1
        %s191 = smul.addr %s190, 2
        %s192 = scalar_lea.vmem [#allocation7], %s191
        %p193 = scmp.lt.s32.totalorder %s25, 0
        %s194 = scalar_select %p193, %s25, 0
        %s195 = smul.addr %s194, 2
        %s196 = scalar_lea.vmem %s2, %s195
        %v197 = vld [vmem:[%s168] sm:$0x3]
        %v198 = vld [vmem:[%s196] sm:$0x3]
        %v199 = vadd.f32 %v197, %v198
        %v200 = vlaneseq
        %vm201 = vcmp.ge.s32.totalorder %v200, 0
        %vm202 = vcmp.lt.s32.totalorder %v200, 256
        %vm203 = vmand %vm201, %vm202
        %204 = vst.msk [vmem:[%s192] sm:$0x3] %vm203, %v199
        %s205 = sand.u32 %s97, 1
        %s206 = scalar_lea.sflag [#allocation6], %s205
        %s207 = sand.u32 %s97, 1
        %s208 = smul.addr %s207, 2
        %s209 = scalar_lea.vmem [#allocation7], %s208
        // Predicated region
        $region33: #{tpu_custom_call.1} parent=27 // pred_check
          %p210 = pneg %p107
        $region34: #{tpu_custom_call.1} parent=27 // pred_check_branch
          %212 = sbr.rel (%p210) target = $region36
        $region35: #{tpu_custom_call.1} parent=27 // pred_region
          %s214 = ssub.s32 32, 32
          %215 = vsyncadd %s206, %s214
          %s216 = smul.addr %s25, 2
          %s217 = smul.addr %s26, 2
          %s218 = sadd.s32 %s216, %s217
          %s219 = smul.addr %s218, 16
          %s220 = scalar_lea.hbm %s3, %s219
          %s222 = sshll.u32 %s209, 4
          %s223 = int_to_ptr.vmem [resolvable:$true] %s222
          %225 = dma.vmem_to_hbm [thread:$0]  %s223, 32, %s220, %s206
        $region36: #{tpu_custom_call.1} parent=27 // pred_fallthru
          _
      $region28: #{tpu_custom_call.1} parent=5 // pred_fallthru
        _
      %p226 = scmp.le.s32.totalorder 2, %s16
      // Predicated region
      $region37: #{tpu_custom_call.1} parent=5 // pred_check
        %p227 = pneg %p226
      $region38: #{tpu_custom_call.1} parent=5 // pred_check_branch
        %229 = sbr.rel (%p227) target = $region40
      $region39: #{tpu_custom_call.1} parent=5 // pred_region
        %s230 = ssub.s32 %s16, 2
        // Predicated region
        $region41: #{tpu_custom_call.1} parent=39 // pred_check
          %p231 = pneg %p113
        $region42: #{tpu_custom_call.1} parent=39 // pred_check_branch
          %233 = sbr.rel (%p231) target = $region44
        $region43: #{tpu_custom_call.1} parent=39 // pred_region
          %s234 = sand.u32 %s98, 1
          %s235 = scalar_lea.sflag [#allocation6], %s234
          %s236 = sand.u32 %s98, 1
          %s237 = smul.addr %s236, 2
          %s238 = scalar_lea.vmem [#allocation7], %s237
          %239 = dma.done %s235, 32
        $region44: #{tpu_custom_call.1} parent=39 // pred_fallthru
          _
      $region40: #{tpu_custom_call.1} parent=5 // pred_fallthru
        _
    $region6: #{tpu_custom_call.1} parent=1 // loop_footer
      %s20 = sadd.s32 1, %s16
    $region7: #{tpu_custom_call.1} parent=1 // loop_footer_branch
      %15 = sbr.rel target = $region3
    $region8: #{tpu_custom_call.1} parent=1 // loop_exit
      _
    %240 = vsyncpa [#allocation5], 1
    %s241 = scalar_lea.sflag [#allocation5], 1
    %242 = vsyncpa %s241, 1
    %243 = vsyncpa [#allocation6], 1
    %s244 = scalar_lea.sflag [#allocation6], 1
    %245 = vsyncpa %s244, 1

</llo_original>
